<compile_context>
chip_gen: v5e
topology: v5e:2x2
jax: 0.10.0
libtpu: 0.0.40
codegen_flags: <defaults>
</compile_context>

<pallas_src>
import functools

import numpy as np
import jax
import jax.numpy as jnp
from jax import lax
from jax.experimental import pallas as pl
from jax.experimental.pallas import tpu as pltpu


def _nearest_upsample_reflect_matrix(size, scale, pad):
    """0/1 matrix M of shape (size*scale + 2*pad, size) with
       (M @ v)[a] = v[ reflect_{size*scale}(a - pad) // scale ]   (torch semantics)."""
    up = size * scale
    assert pad < up, "ReflectionPad2d requires pad < padded-input size"
    idx = np.arange(up + 2 * pad) - pad
    idx = np.where(idx < 0, -idx, idx)
    idx = np.where(idx >= up, 2 * (up - 1) - idx, idx)
    src = idx // scale
    m = np.zeros((up + 2 * pad, size), np.float32)
    m[np.arange(up + 2 * pad), src] = 1.0
    return m


def _vmem_budget_bytes():
    """Conservative per-step VMEM budget for the pipelined buffers."""
    cap = None
    try:
        cap = int(pltpu.get_tpu_info().vmem_capacity_bytes)
    except Exception:
        cap = None
    if cap is None:
        cap = 64 << 20
    # Stay under the default scoped-VMEM limit on every generation (16 MiB on v5e)
    # and leave headroom for Pallas double buffering.
    return min(cap // 4, 12 << 20)


def _pick_row_block(n_batch, h_out, *, H, CW, CWo, k):
    """Largest output-row tile (divisor of Ho, multiple of 8 or == Ho) that fits the
    VMEM budget, while keeping at least 2 total grid steps when possible (v7x has
    2 TensorCores sharded over 'parallel' grid axes)."""
    budget = _vmem_budget_bytes()
    fixed = 4 * (2 * H * CW + 2 * k * CW * CWo + 2 * CWo)      # x block + G + bias (x2 bufs)

    def est(rb):
        return fixed + 4 * 2 * rb * (k * H + CWo)              # EH block + out block (x2)

    cands = [d for d in range(1, h_out + 1)
             if h_out % d == 0 and (d % 8 == 0 or d == h_out)]
    fitting = [d for d in cands if est(d) <= budget]
    if not fitting:
        # TODO(synk): reflection-aware input-row halo tiling for huge feature maps.
        fitting = [min(cands)]
    multi = [d for d in fitting if n_batch * (h_out // d) >= 2]
    pool = multi if multi else fitting
    return max(pool)


def _upsample_conv_kernel(x_ref, eh_ref, g_ref, b_ref, o_ref, *, k):
    # x_ref : (1, H, Cin*W)        original (un-upsampled) image, lanes = (ci, w)
    # eh_ref: (k, row_block, H)    row selectors (upsample + reflect + stride + ky folded)
    # g_ref : (k, Cin*W, Cout*Wo)  column selectors with conv weights + kx taps folded in
    # b_ref : (1, Cout*Wo)         bias, repeated per Cout lane segment
    # o_ref : (1, row_block, Cout*Wo)
    x = x_ref[0].astype(jnp.float32)                               # (H, Cin*W)
    rb, cwo = o_ref.shape[1], o_ref.shape[2]
    acc = jnp.broadcast_to(b_ref[...], (rb, cwo))                  # bias-initialized f32 acc
    for ky in range(k):
        m = jnp.dot(x, g_ref[ky], preferred_element_type=jnp.float32)          # (H, Cout*Wo)
        acc = acc + jnp.dot(eh_ref[ky], m, preferred_element_type=jnp.float32)  # (rb, Cout*Wo)
    o_ref[0] = acc.astype(o_ref.dtype)


def upsample_conv_layer(x_nchw, weight_oikk, bias, *, kernel_size, stride,
                        upsample=None, row_block=None):
    """Forward pass matching torch UpsampleConvLayer.

    x_nchw      : (N, Cin, H, W)
    weight_oikk : (Cout, Cin, k, k)   (torch Conv2d layout)
    bias        : (Cout,)
    """
    N, Cin, H, W = x_nchw.shape
    Cout = weight_oikk.shape[0]
    k = int(kernel_size)
    stride = int(stride)
    pad = k // 2
    s = int(upsample) if upsample else 1

    Hs, Ws = H * s, W * s
    Hp, Wp = Hs + 2 * pad, Ws + 2 * pad
    Ho = (Hp - k) // stride + 1
    Wo = (Wp - k) // stride + 1
    CW, CWo = Cin * W, Cout * Wo

    # ---- host-side constant folding (exact 0/1 selectors + f32 weights) -------------
    eh_full = _nearest_upsample_reflect_matrix(H, s, pad)            # (Hp, H)
    ew_full = _nearest_upsample_reflect_matrix(W, s, pad).T          # (W, Wp)

    r_idx = np.arange(Ho) * stride
    eh_taps = np.stack([eh_full[r_idx + ky, :] for ky in range(k)], axis=0)   # (k, Ho, H)
    j_idx = np.arange(Wo) * stride
    ew_taps = np.stack([ew_full[:, j_idx + kx] for kx in range(k)], axis=0)   # (k, W, Wo)

    # G[ky, ci*W + w, co*Wo + j] = sum_kx weight[co,ci,ky,kx] * ew_taps[kx, w, j]
    g = jnp.einsum("oiyx,xwj->yiwoj",
                   weight_oikk.astype(jnp.float32), jnp.asarray(ew_taps))
    g = g.reshape(k, CW, CWo)
    b_row = jnp.repeat(bias.astype(jnp.float32), Wo).reshape(1, CWo)
    eh_taps = jnp.asarray(eh_taps)

    # Channel-interleaved, lane-dense input layout: (N, H, Cin*W).
    x_wide = jnp.transpose(x_nchw, (0, 2, 1, 3)).reshape(N, H, CW)

    # ---- tiling ----------------------------------------------------------------------
    if row_block is None:
        row_block = _pick_row_block(N, Ho, H=H, CW=CW, CWo=CWo, k=k)
    assert Ho % row_block == 0 and (row_block % 8 == 0 or row_block == Ho)
    n_row_tiles = Ho // row_block

    kernel = functools.partial(_upsample_conv_kernel, k=k)

    out = pl.pallas_call(
        kernel,
        out_shape=jax.ShapeDtypeStruct((N, Ho, CWo), x_nchw.dtype),
        grid_spec=pltpu.PrefetchScalarGridSpec(
            num_scalar_prefetch=0,
            grid=(N, n_row_tiles),
            in_specs=[
                # Original image: block index constant in t -> re-DMA skipped across t.
                pl.BlockSpec((1, H, CW), lambda n, t: (n, 0, 0)),
                pl.BlockSpec((k, row_block, H), lambda n, t: (0, t, 0)),
                pl.BlockSpec((k, CW, CWo), lambda n, t: (0, 0, 0)),
                pl.BlockSpec((1, CWo), lambda n, t: (0, 0)),
            ],
            out_specs=pl.BlockSpec((1, row_block, CWo), lambda n, t: (n, t, 0)),
        ),
        compiler_params=pltpu.CompilerParams(
            dimension_semantics=("parallel", "parallel")),
    )(x_wide, eh_taps, g, b_row)

    # Free layout plumbing back to NCHW.
    return out.reshape(N, Ho, Cout, Wo).transpose(0, 2, 1, 3)


def _reference(x_nchw, weight_oikk, bias, *, kernel_size, stride, upsample=None):
    """Pure-JAX reference (lax.conv) for correctness check."""
    k = kernel_size
    pad = k // 2
    x = x_nchw
    if upsample:
        s = int(upsample)
        x = jnp.repeat(jnp.repeat(x, s, axis=2), s, axis=3)
    if pad > 0:
        x = jnp.pad(x, ((0, 0), (0, 0), (pad, pad), (pad, pad)), mode="reflect")
    y = lax.conv_general_dilated(
        x, weight_oikk, window_strides=(stride, stride), padding="VALID",
        dimension_numbers=("NCHW", "OIHW", "NCHW"))
    return y + bias.reshape(1, -1, 1, 1)


if __name__ == "__main__":
    def run_case(N, Cin, Cout, H, W, k, stride, upsample, key):
        kx, kw, kb = jax.random.split(key, 3)
        x = jax.random.normal(kx, (N, Cin, H, W), dtype=jnp.float32)
        fan_in = Cin * k * k
        bound = 1.0 / (fan_in ** 0.5)
        weight = jax.random.uniform(kw, (Cout, Cin, k, k),
                                    minval=-bound, maxval=bound, dtype=jnp.float32)
        bias = jax.random.uniform(kb, (Cout,), minval=-bound, maxval=bound,
                                  dtype=jnp.float32)
        y = upsample_conv_layer(x, weight, bias, kernel_size=k, stride=stride,
                                upsample=upsample)
        y = jax.block_until_ready(y)
        y_ref = _reference(x, weight, bias, kernel_size=k, stride=stride,
                           upsample=upsample)
        assert y.shape == y_ref.shape, (y.shape, y_ref.shape)
        assert jnp.allclose(y, y_ref, atol=1e-4, rtol=1e-4), "mismatch vs JAX reference"
        return y

    key = jax.random.PRNGKey(0)
    k1, k2 = jax.random.split(key)

    # Module config: UpsampleConvLayer(in_channels=4, out_channels=4, kernel_size=3,
    #                                  stride=1, upsample=2), input (2, 4, 16, 16).
    y = run_case(2, 4, 4, 16, 16, 3, 1, 2, k1)
    assert y.shape == (2, 4, 32, 32)

    # General path: stride=2 together with upsample=2 (exercises the strided selectors).
    run_case(2, 4, 4, 8, 8, 3, 2, 2, k2)

    print("KERNEL_OK")
</pallas_src>

<mosaic_0001>
module attributes {stable_mosaic.version = 11 : i64} {
  func.func @_upsample_conv_kernel(%arg0: i32, %arg1: i32, %arg2: memref<1x16x64xf32, #tpu.memory_space<vmem>>, %arg3: memref<3x32x16xf32, #tpu.memory_space<vmem>>, %arg4: memref<3x64x128xf32, #tpu.memory_space<vmem>>, %arg5: memref<1x128xf32, #tpu.memory_space<vmem>>, %arg6: memref<1x32x128xf32, #tpu.memory_space<vmem>>) attributes {dimension_semantics = [#tpu.dimension_semantics<parallel>, #tpu.dimension_semantics<parallel>], iteration_bounds = array<i64: 2, 1>, scalar_prefetch = 0 : i64, scratch_operands = 0 : i64, tpu.core_type = #tpu.core_type<tc>, window_params = [{transform_indices = @transform_0, window_bounds = array<i64: 1, 16, 64>}, {transform_indices = @transform_1, window_bounds = array<i64: 3, 32, 16>}, {pipeline_mode = #tpu.pipeline_mode<synchronous>, transform_indices = @transform_2, window_bounds = array<i64: 3, 64, 128>}, {pipeline_mode = #tpu.pipeline_mode<synchronous>, transform_indices = @transform_3, window_bounds = array<i64: 1, 128>}, {transform_indices = @transform_4, window_bounds = array<i64: 1, 32, 128>}]} {
    %c0 = arith.constant 0 : index
    %c0_0 = arith.constant 0 : index
    %c0_1 = arith.constant 0 : index
    %0 = vector.load %arg2[%c0, %c0_0, %c0_1] : memref<1x16x64xf32, #tpu.memory_space<vmem>>, vector<1x16x64xf32>
    %1 = vector.shape_cast %0 : vector<1x16x64xf32> to vector<16x64xf32>
    %c0_2 = arith.constant 0 : index
    %c0_3 = arith.constant 0 : index
    %2 = vector.load %arg5[%c0_2, %c0_3] : memref<1x128xf32, #tpu.memory_space<vmem>>, vector<1x128xf32>
    %3 = vector.shape_cast %2 : vector<1x128xf32> to vector<1x128xf32>
    %4 = vector.broadcast %3 : vector<1x128xf32> to vector<32x128xf32>
    %c0_4 = arith.constant 0 : index
    %c0_5 = arith.constant 0 : index
    %c0_6 = arith.constant 0 : index
    %5 = vector.load %arg4[%c0_4, %c0_5, %c0_6] : memref<3x64x128xf32, #tpu.memory_space<vmem>>, vector<1x64x128xf32>
    %6 = vector.shape_cast %5 : vector<1x64x128xf32> to vector<64x128xf32>
    %cst = arith.constant dense<0.000000e+00> : vector<16x128xf32>
    %7 = tpu.matmul %1, %6, %cst {dimension_numbers = #tpu.dot_dimension_numbers<[1], [0], [0], [1], [0, 0, 1, 1], [], []>} : vector<16x64xf32>, vector<64x128xf32>, vector<16x128xf32> -> vector<16x128xf32>
    %c0_7 = arith.constant 0 : index
    %c0_8 = arith.constant 0 : index
    %c0_9 = arith.constant 0 : index
    %8 = vector.load %arg3[%c0_7, %c0_8, %c0_9] : memref<3x32x16xf32, #tpu.memory_space<vmem>>, vector<1x32x16xf32>
    %9 = vector.shape_cast %8 : vector<1x32x16xf32> to vector<32x16xf32>
    %cst_10 = arith.constant dense<0.000000e+00> : vector<32x128xf32>
    %10 = tpu.matmul %9, %7, %cst_10 {dimension_numbers = #tpu.dot_dimension_numbers<[1], [0], [0], [1], [0, 0, 1, 1], [], []>} : vector<32x16xf32>, vector<16x128xf32>, vector<32x128xf32> -> vector<32x128xf32>
    %11 = arith.addf %4, %10 : vector<32x128xf32>
    %c1 = arith.constant 1 : index
    %c0_11 = arith.constant 0 : index
    %c0_12 = arith.constant 0 : index
    %12 = vector.load %arg4[%c1, %c0_11, %c0_12] : memref<3x64x128xf32, #tpu.memory_space<vmem>>, vector<1x64x128xf32>
    %13 = vector.shape_cast %12 : vector<1x64x128xf32> to vector<64x128xf32>
    %cst_13 = arith.constant dense<0.000000e+00> : vector<16x128xf32>
    %14 = tpu.matmul %1, %13, %cst_13 {dimension_numbers = #tpu.dot_dimension_numbers<[1], [0], [0], [1], [0, 0, 1, 1], [], []>} : vector<16x64xf32>, vector<64x128xf32>, vector<16x128xf32> -> vector<16x128xf32>
    %c1_14 = arith.constant 1 : index
    %c0_15 = arith.constant 0 : index
    %c0_16 = arith.constant 0 : index
    %15 = vector.load %arg3[%c1_14, %c0_15, %c0_16] : memref<3x32x16xf32, #tpu.memory_space<vmem>>, vector<1x32x16xf32>
    %16 = vector.shape_cast %15 : vector<1x32x16xf32> to vector<32x16xf32>
    %cst_17 = arith.constant dense<0.000000e+00> : vector<32x128xf32>
    %17 = tpu.matmul %16, %14, %cst_17 {dimension_numbers = #tpu.dot_dimension_numbers<[1], [0], [0], [1], [0, 0, 1, 1], [], []>} : vector<32x16xf32>, vector<16x128xf32>, vector<32x128xf32> -> vector<32x128xf32>
    %18 = arith.addf %11, %17 : vector<32x128xf32>
    %c2 = arith.constant 2 : index
    %c0_18 = arith.constant 0 : index
    %c0_19 = arith.constant 0 : index
    %19 = vector.load %arg4[%c2, %c0_18, %c0_19] : memref<3x64x128xf32, #tpu.memory_space<vmem>>, vector<1x64x128xf32>
    %20 = vector.shape_cast %19 : vector<1x64x128xf32> to vector<64x128xf32>
    %cst_20 = arith.constant dense<0.000000e+00> : vector<16x128xf32>
    %21 = tpu.matmul %1, %20, %cst_20 {dimension_numbers = #tpu.dot_dimension_numbers<[1], [0], [0], [1], [0, 0, 1, 1], [], []>} : vector<16x64xf32>, vector<64x128xf32>, vector<16x128xf32> -> vector<16x128xf32>
    %c2_21 = arith.constant 2 : index
    %c0_22 = arith.constant 0 : index
    %c0_23 = arith.constant 0 : index
    %22 = vector.load %arg3[%c2_21, %c0_22, %c0_23] : memref<3x32x16xf32, #tpu.memory_space<vmem>>, vector<1x32x16xf32>
    %23 = vector.shape_cast %22 : vector<1x32x16xf32> to vector<32x16xf32>
    %cst_24 = arith.constant dense<0.000000e+00> : vector<32x128xf32>
    %24 = tpu.matmul %23, %21, %cst_24 {dimension_numbers = #tpu.dot_dimension_numbers<[1], [0], [0], [1], [0, 0, 1, 1], [], []>} : vector<32x16xf32>, vector<16x128xf32>, vector<32x128xf32> -> vector<32x128xf32>
    %25 = arith.addf %18, %24 : vector<32x128xf32>
    %c0_25 = arith.constant 0 : index
    %c0_26 = arith.constant 0 : index
    %c0_27 = arith.constant 0 : index
    %26 = vector.load %arg6[%c0_25, %c0_26, %c0_27] : memref<1x32x128xf32, #tpu.memory_space<vmem>>, vector<1x32x128xf32>
    %27 = vector.shape_cast %26 : vector<1x32x128xf32> to vector<32x128xf32>
    %28 = vector.shape_cast %25 : vector<32x128xf32> to vector<1x32x128xf32>
    tpu.vector_store %arg6[%c0_25, %c0_26, %c0_27], %28 {strides = array<i32>} : memref<1x32x128xf32, #tpu.memory_space<vmem>>, vector<1x32x128xf32>,
    return
  }
  func.func @transform_0(%arg0: i32, %arg1: i32) -> (i32, i32, i32) {
    %c0_i32 = arith.constant 0 : i32
    %c0_i32_0 = arith.constant 0 : i32
    %c0_i32_1 = arith.constant 0 : i32
    return %arg0, %c0_i32, %c0_i32_0 : i32, i32, i32
  }
  func.func @transform_1(%arg0: i32, %arg1: i32) -> (i32, i32, i32) {
    %c0_i32 = arith.constant 0 : i32
    %c0_i32_0 = arith.constant 0 : i32
    %c0_i32_1 = arith.constant 0 : i32
    return %c0_i32, %arg1, %c0_i32_0 : i32, i32, i32
  }
  func.func @transform_2(%arg0: i32, %arg1: i32) -> (i32, i32, i32) {
    %c0_i32 = arith.constant 0 : i32
    %c0_i32_0 = arith.constant 0 : i32
    %c0_i32_1 = arith.constant 0 : i32
    %c0_i32_2 = arith.constant 0 : i32
    return %c0_i32, %c0_i32_0, %c0_i32_1 : i32, i32, i32
  }
  func.func @transform_3(%arg0: i32, %arg1: i32) -> (i32, i32) {
    %c0_i32 = arith.constant 0 : i32
    %c0_i32_0 = arith.constant 0 : i32
    %c0_i32_1 = arith.constant 0 : i32
    return %c0_i32, %c0_i32_0 : i32, i32
  }
  func.func @transform_4(%arg0: i32, %arg1: i32) -> (i32, i32, i32) {
    %c0_i32 = arith.constant 0 : i32
    %c0_i32_0 = arith.constant 0 : i32
    return %arg0, %arg1, %c0_i32 : i32, i32, i32
  }
}

</mosaic_0001>

<llo_original>
// kernel: tpu_custom_call.1
$region0: #{tpu_custom_call.1}
  #allocation0 [shape = 'u32[]', space=smem, size = 0x4, offset = 0x4, fixed_abs, tag = 'smem constant byte address 0x4 - core index']
  #allocation1 [shape = 'u32[72,128]{1,0:T(1,128)}', space=vmem, size = 0x9000, scoped, tag = 'internal scratch']
  %s0 = inlined_call_operand.vmem [shape: f32[2,16,64], index: 0, kind: input, shape index: {}]
  %s1 = inlined_call_operand.vmem [shape: f32[3,32,16], index: 1, kind: input, shape index: {}]
  %s2 = inlined_call_operand.hbm [shape: f32[3,64,128], index: 2, kind: input, shape index: {}]
  %s3 = inlined_call_operand.vmem [shape: f32[1,128], index: 3, kind: input, shape index: {}]
  %s4 = inlined_call_operand.hbm [shape: f32[2,32,128], index: 4, kind: output, shape index: {}]
  %s5 = sld [smem:[#allocation0]]
  $region53: #{tpu_custom_call.1} parent=0
    _
  %s7 = ssub.s32 1, %s5
  %s8 = scalar_select 0, %s7, %s5
  $region1: #{tpu_custom_call.1} parent=0
    #allocation2 [shape = 'u8[98304]{0}', space=vmem, size = 0x18000, scoped, tag = 'input window, operand 2, single buffered']
    #allocation3 [shape = 's32[2]{0}', space=sflag, size = 0x8, scoped, tag = 'scoped memory for tpu_custom_call.1']
    #allocation4 [shape = 's32[2]{0}', space=sflag, size = 0x8, scoped, tag = 'scoped memory for tpu_custom_call.1']
    #allocation5 [shape = 'u8[32768]{0}', space=vmem, size = 0x8000, scoped, tag = 'output window, operand 0']
    %9 = vsyncpa [#allocation3], 0
    %10 = vsyncpa [#allocation4], 0
    %s11 = scalar_lea.sflag [#allocation4], 1
    %12 = vsyncpa %s11, 0
    loop: start=0, step=1, limit=4
    $region2: #{tpu_custom_call.1} parent=1 // loop_pre_header
      _
    $region3: #{tpu_custom_call.1} parent=1 // loop_header
      %s14 = sphi 0, %s18
      %p15 = scmp.ge.s32.totalorder %s14, 4
      %s21 = sphi 0, %s33
      %s22 = sphi 0, %s29
      %s23 = sphi 0, %s21
      %s24 = sphi 0, %s22
      %s25 = sphi 0, %s23
      %s26 = sphi 0, %s24
      %s36 = sphi 0, %s38
      %s39 = sphi 0, %s36
      %s40 = sphi 0, %s39
      %s56 = sphi 0, %s40
      %s62 = sphi 0, %s64
      %s65 = sphi 0, %s62
      %s66 = sphi 0, %s65
      %s82 = sphi 0, %s66
      %s86 = sphi 0, %s86
      %s88 = sphi 0, %s86
      %s89 = sphi 0, %s88
      %s103 = sphi 0, %s89
      %s107 = sphi 0, %s107
      %s109 = sphi 0, %s107
      %s110 = sphi 0, %s109
      %s124 = sphi 0, %s110
      %s132 = sphi 0, %s134
      %s135 = sphi 0, %s132
      %s136 = sphi 0, %s135
      %s152 = sphi 0, %s136
    $region4: #{tpu_custom_call.1} parent=1 // loop_header_branch
      %17 = sbr.rel (%p15) target = $region8
    $region5: #{tpu_custom_call.1} parent=1 // loop_body
      %s19 = ssub.s32 %s14, 1
      %s20 = ssub.s32 %s14, 2
      %s27 = sadd.s32 1, %s22
      %p28 = scmp.ge.s32.totalorder %s27, 1
      %s29 = scalar_select %p28, 0, %s27
      %s30 = sadd.s32 1, %s21
      %s31 = scalar_select %p28, %s30, %s21
      %p32 = scmp.ge.s32.totalorder %s31, 2
      %s33 = scalar_select %p32, 0, %s31
      %s34 = ssub.s32 %s21, %s33
      %p35 = scmp.eq.s32.totalorder %s34, 0
      %s37 = sadd.s32 %s36, 1
      %s38 = scalar_select %p35, %s36, %s37
      %p41 = pneg %p35
      %p42 = scmp.eq.s32.totalorder %s14, 1
      %p43 = por %p41, %p42
      %p44 = scmp.ne.s32.totalorder %s36, %s39
      %p45 = scmp.eq.s32.totalorder %s14, 0
      %p46 = por %p44, %p45
      %p47 = scmp.ne.s32.totalorder %s36, %s39
      %p48 = scmp.eq.s32.totalorder %s19, 1
      %p49 = por %p47, %p48
      %p50 = scmp.ne.s32.totalorder %s39, %s40
      %p51 = scmp.eq.s32.totalorder %s19, 0
      %p52 = por %p50, %p51
      %p53 = scmp.ne.s32.totalorder %s39, %s40
      %p54 = scmp.eq.s32.totalorder %s20, 1
      %p55 = por %p53, %p54
      %p57 = scmp.ne.s32.totalorder %s40, %s56
      %p58 = scmp.eq.s32.totalorder %s20, 0
      %p59 = por %p57, %p58
      %s60 = ssub.s32 %s22, %s29
      %p61 = scmp.eq.s32.totalorder %s60, 0
      %s63 = sadd.s32 %s62, 1
      %s64 = scalar_select %p61, %s62, %s63
      %p67 = pneg %p61
      %p68 = scmp.eq.s32.totalorder %s14, 1
      %p69 = por %p67, %p68
      %p70 = scmp.ne.s32.totalorder %s62, %s65
      %p71 = scmp.eq.s32.totalorder %s14, 0
      %p72 = por %p70, %p71
      %p73 = scmp.ne.s32.totalorder %s62, %s65
      %p74 = scmp.eq.s32.totalorder %s19, 1
      %p75 = por %p73, %p74
      %p76 = scmp.ne.s32.totalorder %s65, %s66
      %p77 = scmp.eq.s32.totalorder %s19, 0
      %p78 = por %p76, %p77
      %p79 = scmp.ne.s32.totalorder %s65, %s66
      %p80 = scmp.eq.s32.totalorder %s20, 1
      %p81 = por %p79, %p80
      %p83 = scmp.ne.s32.totalorder %s66, %s82
      %p84 = scmp.eq.s32.totalorder %s20, 0
      %p85 = por %p83, %p84
      %s87 = sadd.s32 %s86, 1
      %p90 = scmp.eq.s32.totalorder %s14, 1
      %p91 = scmp.ne.s32.totalorder %s86, %s88
      %p92 = scmp.eq.s32.totalorder %s14, 0
      %p93 = por %p91, %p92
      %p94 = scmp.ne.s32.totalorder %s86, %s88
      %p95 = scmp.eq.s32.totalorder %s19, 1
      %p96 = por %p94, %p95
      %p97 = scmp.ne.s32.totalorder %s88, %s89
      %p98 = scmp.eq.s32.totalorder %s19, 0
      %p99 = por %p97, %p98
      %p100 = scmp.ne.s32.totalorder %s88, %s89
      %p101 = scmp.eq.s32.totalorder %s20, 1
      %p102 = por %p100, %p101
      %p104 = scmp.ne.s32.totalorder %s89, %s103
      %p105 = scmp.eq.s32.totalorder %s20, 0
      %p106 = por %p104, %p105
      %s108 = sadd.s32 %s107, 1
      %p111 = scmp.eq.s32.totalorder %s14, 1
      %p112 = scmp.ne.s32.totalorder %s107, %s109
      %p113 = scmp.eq.s32.totalorder %s14, 0
      %p114 = por %p112, %p113
      %p115 = scmp.ne.s32.totalorder %s107, %s109
      %p116 = scmp.eq.s32.totalorder %s19, 1
      %p117 = por %p115, %p116
      %p118 = scmp.ne.s32.totalorder %s109, %s110
      %p119 = scmp.eq.s32.totalorder %s19, 0
      %p120 = por %p118, %p119
      %p121 = scmp.ne.s32.totalorder %s109, %s110
      %p122 = scmp.eq.s32.totalorder %s20, 1
      %p123 = por %p121, %p122
      %p125 = scmp.ne.s32.totalorder %s110, %s124
      %p126 = scmp.eq.s32.totalorder %s20, 0
      %p127 = por %p125, %p126
      %s128 = ssub.s32 %s21, %s33
      %s129 = ssub.s32 %s22, %s29
      %s130 = sor.u32 %s128, %s129
      %p131 = scmp.eq.s32.totalorder %s130, 0
      %s133 = sadd.s32 %s132, 1
      %s134 = scalar_select %p131, %s132, %s133
      %p137 = pneg %p131
      %p138 = scmp.eq.s32.totalorder %s14, 1
      %p139 = por %p137, %p138
      %p140 = scmp.ne.s32.totalorder %s132, %s135
      %p141 = scmp.eq.s32.totalorder %s14, 0
      %p142 = por %p140, %p141
      %p143 = scmp.ne.s32.totalorder %s132, %s135
      %p144 = scmp.eq.s32.totalorder %s19, 1
      %p145 = por %p143, %p144
      %p146 = scmp.ne.s32.totalorder %s135, %s136
      %p147 = scmp.eq.s32.totalorder %s19, 0
      %p148 = por %p146, %p147
      %p149 = scmp.ne.s32.totalorder %s135, %s136
      %p150 = scmp.eq.s32.totalorder %s20, 1
      %p151 = por %p149, %p150
      %p153 = scmp.ne.s32.totalorder %s136, %s152
      %p154 = scmp.eq.s32.totalorder %s20, 0
      %p155 = por %p153, %p154
      %p156 = scmp.le.s32.totalorder 1, %s14
      %p157 = scmp.lt.s32.totalorder %s14, 3
      %p158 = pnand %p156, %p157
      %p159 = pneg %p158
      // Predicated region
      $region9: #{tpu_custom_call.1} parent=5 // pred_check
        _
      $region10: #{tpu_custom_call.1} parent=5 // pred_check_branch
        %161 = sbr.rel (%p158) target = $region12
      $region11: #{tpu_custom_call.1} parent=5 // pred_region
        %s162 = ssub.s32 %s14, 1
        // Predicated region
        $region13: #{tpu_custom_call.1} parent=11 // pred_check
          %p163 = pneg %p78
        $region14: #{tpu_custom_call.1} parent=11 // pred_check_branch
          %165 = sbr.rel (%p163) target = $region16
        $region15: #{tpu_custom_call.1} parent=11 // pred_region
          %s166 = smul.u32 4, %s24
          %p167 = scmp.lt.s32.totalorder %s166, 3
          %s168 = scalar_select %p167, %s166, 3
          %s169 = smul.addr %s168, 8
          %s170 = scalar_lea.vmem %s1, %s169
          %s171 = smul.u32 4, %s24
        $region16: #{tpu_custom_call.1} parent=11 // pred_fallthru
          _
        // Predicated region
        $region17: #{tpu_custom_call.1} parent=11 // pred_check
          %p172 = pneg %p99
        $region18: #{tpu_custom_call.1} parent=11 // pred_check_branch
          %174 = sbr.rel (%p172) target = $region20
        $region19: #{tpu_custom_call.1} parent=11 // pred_region
          %176 = vsyncadd [#allocation3], 0
          %s177 = sshll.u32 %s2, 4
          %s178 = int_to_ptr.hbm [resolvable:$true] %s177
          %s179 = sshll.u32 [#allocation2], 4
          %s180 = int_to_ptr.vmem [resolvable:$true] %s179
          %185 = dma.hbm_to_vmem [thread:$0]  %s178, 3072, %s180, [#allocation3], 128, 128, 8
        $region20: #{tpu_custom_call.1} parent=11 // pred_fallthru
          _
        // Predicated region
        $region21: #{tpu_custom_call.1} parent=11 // pred_check
          %p186 = pneg %p120
        $region22: #{tpu_custom_call.1} parent=11 // pred_check_branch
          %188 = sbr.rel (%p186) target = $region24
        $region23: #{tpu_custom_call.1} parent=11 // pred_region
          _
        $region24: #{tpu_custom_call.1} parent=11 // pred_fallthru
          _
      $region12: #{tpu_custom_call.1} parent=5 // pred_fallthru
        _
      %p189 = scmp.lt.s32.totalorder %s14, 2
      // Predicated region
      $region25: #{tpu_custom_call.1} parent=5 // pred_check
        %p190 = pneg %p189
      $region26: #{tpu_custom_call.1} parent=5 // pred_check_branch
        %192 = sbr.rel (%p190) target = $region28
      $region27: #{tpu_custom_call.1} parent=5 // pred_region
        // Predicated region
        $region29: #{tpu_custom_call.1} parent=27 // pred_check
          %p193 = pneg %p46
        $region30: #{tpu_custom_call.1} parent=27 // pred_check_branch
          %195 = sbr.rel (%p193) target = $region32
        $region31: #{tpu_custom_call.1} parent=27 // pred_region
          %p196 = scmp.lt.s32.totalorder %s21, 1
          %s197 = scalar_select %p196, %s21, 1
          %s198 = smul.addr %s197, 2
          %s199 = smul.addr %s198, 8
          %s200 = scalar_lea.vmem %s0, %s199
        $region32: #{tpu_custom_call.1} parent=27 // pred_fallthru
          _
      $region28: #{tpu_custom_call.1} parent=5 // pred_fallthru
        _
      %p201 = scmp.le.s32.totalorder 1, %s14
      %p202 = scmp.lt.s32.totalorder %s14, 3
      %p203 = pnand %p201, %p202
      %p204 = pneg %p203
      // Predicated region
      $region33: #{tpu_custom_call.1} parent=5 // pred_check
        _
      $region34: #{tpu_custom_call.1} parent=5 // pred_check_branch
        %206 = sbr.rel (%p203) target = $region36
      $region35: #{tpu_custom_call.1} parent=5 // pred_region
        %s207 = ssub.s32 %s14, 1
        // Predicated region
        $region37: #{tpu_custom_call.1} parent=35 // pred_check
          %p208 = pneg %p99
        $region38: #{tpu_custom_call.1} parent=35 // pred_check_branch
          %210 = sbr.rel (%p208) target = $region40
        $region39: #{tpu_custom_call.1} parent=35 // pred_region
          %212 = dma.done [#allocation3], 3072
        $region40: #{tpu_custom_call.1} parent=35 // pred_fallthru
          _
        %p213 = scmp.lt.s32.totalorder %s23, 1
        %s214 = scalar_select %p213, %s23, 1
        %s215 = smul.addr %s214, 2
        %s216 = smul.addr %s215, 8
        %s217 = scalar_lea.vmem %s0, %s216
        %p218 = pneg %p52
        %p219 = pneg %p49
        %s220 = smul.u32 4, %s24
        %p221 = scmp.lt.s32.totalorder %s220, 3
        %s222 = scalar_select %p221, %s220, 3
        %s223 = smul.addr %s222, 8
        %s224 = scalar_lea.vmem %s1, %s223
        %p225 = pneg %p78
        %p226 = pneg %p75
        %p227 = pneg %p99
        %p228 = pneg %p96
        %p229 = pneg %p120
        %p230 = pneg %p117
        %p231 = pneg %p148
        %p232 = pneg %p145
        %s233 = sand.u32 %s135, 1
        %s234 = scalar_lea.sflag [#allocation4], %s233
        %s235 = sand.u32 %s135, 1
        %s236 = smul.addr %s235, 32
        %s237 = scalar_lea.vmem [#allocation5], %s236
        %p238 = scmp.lt.s32.totalorder %s23, 1
        %s239 = scalar_select %p238, %s23, 1
        %s240 = smul.addr %s239, 2
        %s241 = smul.addr %s240, 8
        %s242 = scalar_lea.vmem %s0, %s241
        %s243 = smul.u32 4, %s24
        %p244 = scmp.lt.s32.totalorder %s243, 3
        %s245 = scalar_select %p244, %s243, 3
        %s246 = smul.addr %s245, 8
        %s247 = scalar_lea.vmem %s1, %s246
        %s248 = smul.u32 4, %s24
        %s249 = smul.u32 4, %s24
        %v250 = vld [vmem:[%s242] sm:$0xff]
        %v251 = vld [vmem:[%s242 + $0x8] sm:$0xff]
        %v252 = vld [vmem:[%s3] sm:$0x1]
        %v254 = vperm.slane %v252, 0
        %v256 = vld [vmem:[#allocation2] sm:$0xff]
        %v257 = vld [vmem:[#allocation2 + $0x8] sm:$0xff]
        %v258 = vld [vmem:[#allocation2 + $0x10] sm:$0xff]
        %v259 = vld [vmem:[#allocation2 + $0x18] sm:$0xff]
        %v260 = vld [vmem:[#allocation2 + $0x20] sm:$0xff]
        %v261 = vld [vmem:[#allocation2 + $0x28] sm:$0xff]
        %v262 = vld [vmem:[#allocation2 + $0x30] sm:$0xff]
        %v263 = vld [vmem:[#allocation2 + $0x38] sm:$0xff]
        %vm264 = vcmask 523264
        %v266 = vsel %vm264, %v250, 0
        %v269 = vsel %vm264, %v251, 0
        %271 = vmatpush.msra.mxu0 0.0
        %272 = vmatpush.msra.mxu0 0.0
        %273 = vmatpush.msra.mxu0 0.0
        %274 = vmatpush.msra.mxu0 0.0
        %275 = vmatpush.msra.mxu0 0.0
        %276 = vmatpush.msra.mxu0 0.0
        %277 = vmatpush.msra.mxu0 0.0
        %278 = vmatpush.msra.mxu0 0.0
        %279 = vmatpush.msra.mxu0 %v263
        %280 = vmatpush.msra.mxu0 %v262
        %281 = vmatpush.msra.mxu0 %v261
        %282 = vmatpush.msra.mxu0 %v260
        %283 = vmatpush.msra.mxu0 %v259
        %284 = vmatpush.msra.mxu0 %v258
        %285 = vmatpush.msra.mxu0 %v257
        %286 = vmatpush.msra.mxu0 %v256
        %287 = vmatmul.f32.gmra.mxu0 %v266
        %v288 = vpop.f32.mrf.mxu0
        %v289 = vadd.f32 0.0, %v288
        %290 = vmatmul.f32.gmra.mxu0 %v269
        %v291 = vpop.f32.mrf.mxu0
        %v292 = vadd.f32 0.0, %v291
        %293 = vdwg.mxu0
        %v294 = vld [vmem:[%s247] sm:$0xff]
        %v295 = vld [vmem:[%s247 + $0x8] sm:$0xff]
        %v296 = vld [vmem:[%s247 + $0x10] sm:$0xff]
        %v297 = vld [vmem:[%s247 + $0x18] sm:$0xff]
        %vm298 = vcmask 130048
        %v300 = vsel %vm298, %v294, 0
        %v303 = vsel %vm298, %v295, 0
        %v306 = vsel %vm298, %v296, 0
        %v309 = vsel %vm298, %v297, 0
        %311 = vmatpush.msra.mxu0 0.0
        %312 = vmatpush.msra.mxu0 0.0
        %313 = vmatpush.msra.mxu0 0.0
        %314 = vmatpush.msra.mxu0 0.0
        %315 = vmatpush.msra.mxu0 0.0
        %316 = vmatpush.msra.mxu0 0.0
        %317 = vmatpush.msra.mxu0 0.0
        %318 = vmatpush.msra.mxu0 0.0
        %319 = vmatpush.msra.mxu0 0.0
        %320 = vmatpush.msra.mxu0 0.0
        %321 = vmatpush.msra.mxu0 0.0
        %322 = vmatpush.msra.mxu0 0.0
        %323 = vmatpush.msra.mxu0 0.0
        %324 = vmatpush.msra.mxu0 0.0
        %325 = vmatpush.msra.mxu0 %v292
        %326 = vmatpush.msra.mxu0 %v289
        %327 = vmatmul.f32.gmra.mxu0 %v300
        %v328 = vpop.f32.mrf.mxu0
        %v329 = vadd.f32 0.0, %v328
        %330 = vmatmul.f32.gmra.mxu0 %v303
        %v331 = vpop.f32.mrf.mxu0
        %v332 = vadd.f32 0.0, %v331
        %333 = vmatmul.f32.gmra.mxu0 %v306
        %v334 = vpop.f32.mrf.mxu0
        %v335 = vadd.f32 0.0, %v334
        %336 = vmatmul.f32.gmra.mxu0 %v309
        %v337 = vpop.f32.mrf.mxu0
        %v338 = vadd.f32 0.0, %v337
        %339 = vdwg.mxu0
        %v340 = vadd.f32 %v254, %v329
        %v341 = vadd.f32 %v254, %v332
        %v342 = vadd.f32 %v254, %v335
        %v343 = vadd.f32 %v254, %v338
        %s344 = scalar_lea.vmem [#allocation2], 64
        %v345 = vld [vmem:[%s344] sm:$0xff]
        %v346 = vld [vmem:[%s344 + $0x8] sm:$0xff]
        %v347 = vld [vmem:[%s344 + $0x10] sm:$0xff]
        %v348 = vld [vmem:[%s344 + $0x18] sm:$0xff]
        %v349 = vld [vmem:[%s344 + $0x20] sm:$0xff]
        %v350 = vld [vmem:[%s344 + $0x28] sm:$0xff]
        %v351 = vld [vmem:[%s344 + $0x30] sm:$0xff]
        %v352 = vld [vmem:[%s344 + $0x38] sm:$0xff]
        %353 = vmatpush.msra.mxu0 0.0
        %354 = vmatpush.msra.mxu0 0.0
        %355 = vmatpush.msra.mxu0 0.0
        %356 = vmatpush.msra.mxu0 0.0
        %357 = vmatpush.msra.mxu0 0.0
        %358 = vmatpush.msra.mxu0 0.0
        %359 = vmatpush.msra.mxu0 0.0
        %360 = vmatpush.msra.mxu0 0.0
        %361 = vmatpush.msra.mxu0 %v352
        %362 = vmatpush.msra.mxu0 %v351
        %363 = vmatpush.msra.mxu0 %v350
        %364 = vmatpush.msra.mxu0 %v349
        %365 = vmatpush.msra.mxu0 %v348
        %366 = vmatpush.msra.mxu0 %v347
        %367 = vmatpush.msra.mxu0 %v346
        %368 = vmatpush.msra.mxu0 %v345
        %369 = vmatmul.f32.gmra.mxu0 %v266
        %v370 = vpop.f32.mrf.mxu0
        %v371 = vadd.f32 0.0, %v370
        %372 = vmatmul.f32.gmra.mxu0 %v269
        %v373 = vpop.f32.mrf.mxu0
        %v374 = vadd.f32 0.0, %v373
        %375 = vdwg.mxu0
        %s376 = scalar_lea.vmem %s247, 32
        %v377 = vld [vmem:[%s376] sm:$0xff]
        %v378 = vld [vmem:[%s376 + $0x8] sm:$0xff]
        %v379 = vld [vmem:[%s376 + $0x10] sm:$0xff]
        %v380 = vld [vmem:[%s376 + $0x18] sm:$0xff]
        %v382 = vsel %vm298, %v377, 0
        %v385 = vsel %vm298, %v378, 0
        %v388 = vsel %vm298, %v379, 0
        %v391 = vsel %vm298, %v380, 0
        %393 = vmatpush.msra.mxu0 0.0
        %394 = vmatpush.msra.mxu0 0.0
        %395 = vmatpush.msra.mxu0 0.0
        %396 = vmatpush.msra.mxu0 0.0
        %397 = vmatpush.msra.mxu0 0.0
        %398 = vmatpush.msra.mxu0 0.0
        %399 = vmatpush.msra.mxu0 0.0
        %400 = vmatpush.msra.mxu0 0.0
        %401 = vmatpush.msra.mxu0 0.0
        %402 = vmatpush.msra.mxu0 0.0
        %403 = vmatpush.msra.mxu0 0.0
        %404 = vmatpush.msra.mxu0 0.0
        %405 = vmatpush.msra.mxu0 0.0
        %406 = vmatpush.msra.mxu0 0.0
        %407 = vmatpush.msra.mxu0 %v374
        %408 = vmatpush.msra.mxu0 %v371
        %409 = vmatmul.f32.gmra.mxu0 %v382
        %v410 = vpop.f32.mrf.mxu0
        %v411 = vadd.f32 0.0, %v410
        %412 = vmatmul.f32.gmra.mxu0 %v385
        %v413 = vpop.f32.mrf.mxu0
        %v414 = vadd.f32 0.0, %v413
        %415 = vmatmul.f32.gmra.mxu0 %v388
        %v416 = vpop.f32.mrf.mxu0
        %v417 = vadd.f32 0.0, %v416
        %418 = vmatmul.f32.gmra.mxu0 %v391
        %v419 = vpop.f32.mrf.mxu0
        %v420 = vadd.f32 0.0, %v419
        %421 = vdwg.mxu0
        %v422 = vadd.f32 %v340, %v411
        %v423 = vadd.f32 %v341, %v414
        %v424 = vadd.f32 %v342, %v417
        %v425 = vadd.f32 %v343, %v420
        %s426 = scalar_lea.vmem [#allocation2], 128
        %v427 = vld [vmem:[%s426] sm:$0xff]
        %v428 = vld [vmem:[%s426 + $0x8] sm:$0xff]
        %v429 = vld [vmem:[%s426 + $0x10] sm:$0xff]
        %v430 = vld [vmem:[%s426 + $0x18] sm:$0xff]
        %v431 = vld [vmem:[%s426 + $0x20] sm:$0xff]
        %v432 = vld [vmem:[%s426 + $0x28] sm:$0xff]
        %v433 = vld [vmem:[%s426 + $0x30] sm:$0xff]
        %v434 = vld [vmem:[%s426 + $0x38] sm:$0xff]
        %435 = vmatpush.msra.mxu0 0.0
        %436 = vmatpush.msra.mxu0 0.0
        %437 = vmatpush.msra.mxu0 0.0
        %438 = vmatpush.msra.mxu0 0.0
        %439 = vmatpush.msra.mxu0 0.0
        %440 = vmatpush.msra.mxu0 0.0
        %441 = vmatpush.msra.mxu0 0.0
        %442 = vmatpush.msra.mxu0 0.0
        %443 = vmatpush.msra.mxu0 %v434
        %444 = vmatpush.msra.mxu0 %v433
        %445 = vmatpush.msra.mxu0 %v432
        %446 = vmatpush.msra.mxu0 %v431
        %447 = vmatpush.msra.mxu0 %v430
        %448 = vmatpush.msra.mxu0 %v429
        %449 = vmatpush.msra.mxu0 %v428
        %450 = vmatpush.msra.mxu0 %v427
        %451 = vmatmul.f32.gmra.mxu0 %v266
        %v452 = vpop.f32.mrf.mxu0
        %v453 = vadd.f32 0.0, %v452
        %454 = vmatmul.f32.gmra.mxu0 %v269
        %v455 = vpop.f32.mrf.mxu0
        %v456 = vadd.f32 0.0, %v455
        %457 = vdwg.mxu0
        %s458 = scalar_lea.vmem %s247, 64
        %v459 = vld [vmem:[%s458] sm:$0xff]
        %v460 = vld [vmem:[%s458 + $0x8] sm:$0xff]
        %v461 = vld [vmem:[%s458 + $0x10] sm:$0xff]
        %v462 = vld [vmem:[%s458 + $0x18] sm:$0xff]
        %v464 = vsel %vm298, %v459, 0
        %v467 = vsel %vm298, %v460, 0
        %v470 = vsel %vm298, %v461, 0
        %v473 = vsel %vm298, %v462, 0
        %475 = vmatpush.msra.mxu0 0.0
        %476 = vmatpush.msra.mxu0 0.0
        %477 = vmatpush.msra.mxu0 0.0
        %478 = vmatpush.msra.mxu0 0.0
        %479 = vmatpush.msra.mxu0 0.0
        %480 = vmatpush.msra.mxu0 0.0
        %481 = vmatpush.msra.mxu0 0.0
        %482 = vmatpush.msra.mxu0 0.0
        %483 = vmatpush.msra.mxu0 0.0
        %484 = vmatpush.msra.mxu0 0.0
        %485 = vmatpush.msra.mxu0 0.0
        %486 = vmatpush.msra.mxu0 0.0
        %487 = vmatpush.msra.mxu0 0.0
        %488 = vmatpush.msra.mxu0 0.0
        %489 = vmatpush.msra.mxu0 %v456
        %490 = vmatpush.msra.mxu0 %v453
        %491 = vmatmul.f32.gmra.mxu0 %v464
        %v492 = vpop.f32.mrf.mxu0
        %v493 = vadd.f32 0.0, %v492
        %494 = vmatmul.f32.gmra.mxu0 %v467
        %v495 = vpop.f32.mrf.mxu0
        %v496 = vadd.f32 0.0, %v495
        %497 = vmatmul.f32.gmra.mxu0 %v470
        %v498 = vpop.f32.mrf.mxu0
        %v499 = vadd.f32 0.0, %v498
        %500 = vmatmul.f32.gmra.mxu0 %v473
        %v501 = vpop.f32.mrf.mxu0
        %v502 = vadd.f32 0.0, %v501
        %503 = vdwg.mxu0
        %v504 = vadd.f32 %v422, %v493
        %v505 = vadd.f32 %v423, %v496
        %v506 = vadd.f32 %v424, %v499
        %v507 = vadd.f32 %v425, %v502
        %508 = vst [vmem:[%s237] sm:$0xff] %v504
        %509 = vst [vmem:[%s237 + $0x8] sm:$0xff] %v505
        %510 = vst [vmem:[%s237 + $0x10] sm:$0xff] %v506
        %511 = vst [vmem:[%s237 + $0x18] sm:$0xff] %v507
        %s512 = sand.u32 %s135, 1
        %s513 = scalar_lea.sflag [#allocation4], %s512
        %s514 = sand.u32 %s135, 1
        %s515 = smul.addr %s514, 32
        %s516 = scalar_lea.vmem [#allocation5], %s515
        // Predicated region
        $region41: #{tpu_custom_call.1} parent=35 // pred_check
          %p517 = pneg %p145
        $region42: #{tpu_custom_call.1} parent=35 // pred_check_branch
          %519 = sbr.rel (%p517) target = $region44
        $region43: #{tpu_custom_call.1} parent=35 // pred_region
          %s520 = smul.u32 4, %s24
          %522 = vsyncadd %s513, 0
          %s523 = smul.addr %s23, 4
          %s524 = sadd.s32 %s520, %s523
          %s525 = smul.addr %s524, 8
          %s526 = scalar_lea.hbm %s4, %s525
          %s527 = sshll.u32 %s516, 4
          %s528 = int_to_ptr.vmem [resolvable:$true] %s527
          %s529 = sshll.u32 %s526, 4
          %s530 = int_to_ptr.hbm [resolvable:$true] %s529
          %535 = dma.vmem_to_hbm [thread:$0]  %s528, 512, %s530, %s513, 128, 128, 8
        $region44: #{tpu_custom_call.1} parent=35 // pred_fallthru
          _
      $region36: #{tpu_custom_call.1} parent=5 // pred_fallthru
        _
      %p536 = scmp.le.s32.totalorder 2, %s14
      // Predicated region
      $region45: #{tpu_custom_call.1} parent=5 // pred_check
        %p537 = pneg %p536
      $region46: #{tpu_custom_call.1} parent=5 // pred_check_branch
        %539 = sbr.rel (%p537) target = $region48
      $region47: #{tpu_custom_call.1} parent=5 // pred_region
        %s540 = ssub.s32 %s14, 2
        // Predicated region
        $region49: #{tpu_custom_call.1} parent=47 // pred_check
          %p541 = pneg %p151
        $region50: #{tpu_custom_call.1} parent=47 // pred_check_branch
          %543 = sbr.rel (%p541) target = $region52
        $region51: #{tpu_custom_call.1} parent=47 // pred_region
          %s544 = sand.u32 %s136, 1
          %s545 = scalar_lea.sflag [#allocation4], %s544
          %s546 = sand.u32 %s136, 1
          %s547 = smul.addr %s546, 32
          %s548 = scalar_lea.vmem [#allocation5], %s547
          %550 = dma.done %s545, 512
        $region52: #{tpu_custom_call.1} parent=47 // pred_fallthru
          _
      $region48: #{tpu_custom_call.1} parent=5 // pred_fallthru
        _
    $region6: #{tpu_custom_call.1} parent=1 // loop_footer
      %s18 = sadd.s32 1, %s14
    $region7: #{tpu_custom_call.1} parent=1 // loop_footer_branch
      %13 = sbr.rel target = $region3
    $region8: #{tpu_custom_call.1} parent=1 // loop_exit
      _
    %551 = vsyncpa [#allocation3], 1
    %s552 = scalar_lea.sflag [#allocation3], 1
    %553 = vsyncpa %s552, 1
    %554 = vsyncpa [#allocation4], 1
    %s555 = scalar_lea.sflag [#allocation4], 1
    %556 = vsyncpa %s555, 1

</llo_original>
